<compile_context>
chip_gen: v7x
topology: tpu7x:2x2x1
jax: 0.10.0
libtpu: 0.0.40
codegen_flags: <defaults>
</compile_context>

<pallas_src>
import jax
import jax.numpy as jnp
from jax.experimental import pallas as pl
from jax.experimental.pallas import tpu as pltpu


def _round_up(a, b):
    return ((a + b - 1) // b) * b


# -----------------------------------------------------------------------------
# Kernels
# -----------------------------------------------------------------------------
def _conv_gemm_kernel_single_k(w_ref, x_ref, b_ref, o_ref):
    """Single-K-tile case: o = relu(W @ X + b) in one shot (no accumulator).

    w_ref: (Cout_pad, K)   compute dtype, grid-invariant -> resident
    x_ref: (K, tn)         compute dtype, streamed im2col columns
    b_ref: (Cout_pad, 1)   f32, grid-invariant -> resident
    o_ref: (Cout_pad, tn)  out dtype
    """
    y = jnp.dot(w_ref[...], x_ref[...], preferred_element_type=jnp.float32)
    o_ref[...] = jnp.maximum(y + b_ref[...], 0.0).astype(o_ref.dtype)


def _conv_gemm_kernel_multi_k(w_ref, x_ref, b_ref, o_ref, acc_ref):
    """General case: K tiled on the last (arbitrary) grid axis, f32 accumulator."""
    k = pl.program_id(1)

    @pl.when(k == 0)
    def _():
        acc_ref[...] = jnp.zeros_like(acc_ref)

    acc_ref[...] += jnp.dot(w_ref[...], x_ref[...],
                            preferred_element_type=jnp.float32)

    @pl.when(k == pl.num_programs(1) - 1)
    def _():
        o_ref[...] = jnp.maximum(acc_ref[...] + b_ref[...],
                                 0.0).astype(o_ref.dtype)


# -----------------------------------------------------------------------------
# Wrapper
# -----------------------------------------------------------------------------
def conv_module_forward(x, w, b, *, tn=512, tk=512, max_single_k=2048,
                        compute_dtype=jnp.bfloat16, out_dtype=jnp.float32,
                        vmem_budget_bytes=24 * 1024 * 1024):
    """ConvModule forward (inference): ReLU(Conv2d(x) + b); dropout = identity.

    x: (B, Cin, H, W) f32    (PyTorch NCHW)
    w: (Cout, Cin, kH, kW) f32 (PyTorch OIHW)
    b: (Cout,) f32
    returns: (B, Cout, H-kH+1, W-kW+1) in x.dtype
    """
    # TODO(synk): nn.Dropout training-mode masking + 1/(1-p) scaling is not
    #             implemented; at inference it is the identity (computed here).
    B, Cin, H, W = x.shape
    Cout, Cin2, kH, kW = w.shape
    assert Cin == Cin2
    Ho, Wo = H - kH + 1, W - kW + 1

    K = Cin * kH * kW
    M = B * Ho * Wo
    Cout_pad = _round_up(Cout, 16)        # sublane pad only (not 128 lanes)

    single_k = K <= max_single_k
    if single_k:
        tk_eff, K_pad = K, K
    else:
        tk_eff = max(128, _round_up(min(tk, K), 128))
        K_pad = _round_up(K, tk_eff)

    # ---- lane (M) tile selection --------------------------------------------
    tn = min(tn, _round_up(M, 128))
    if _round_up(M, tn) // tn < 2 and tn > 128:
        # Ensure >=2 parallel grid steps so both v7x TensorCores get work.
        tn = max(128, _round_up(_round_up(M, 128) // 2, 128))

    in_item = jnp.dtype(compute_dtype).itemsize
    out_item = jnp.dtype(out_dtype).itemsize

    def _vmem_bytes(tn_):
        w_bytes = ((1 if single_k else 2) * Cout_pad
                   * (K_pad if single_k else tk_eff) * in_item)
        x_bytes = 2 * tk_eff * tn_ * in_item          # double-buffered patches
        o_bytes = 2 * Cout_pad * tn_ * out_item       # double-buffered output
        acc_bytes = 0 if single_k else Cout_pad * tn_ * 4
        return w_bytes + x_bytes + o_bytes + acc_bytes + Cout_pad * 4

    while tn > 128 and _vmem_bytes(tn) > vmem_budget_bytes:
        tn //= 2
    M_pad = _round_up(M, tn)

    # ---- single-pass im2col into the transposed (K, M) patch matrix ---------
    # K-axis order is (cin, kh, kw), matching w.reshape(Cout, Cin*kH*kW).
    xt = jnp.transpose(x, (1, 0, 2, 3)).astype(compute_dtype)      # (Cin,B,H,W)
    shifts = [xt[:, :, kh:kh + Ho, kw:kw + Wo]
              for kh in range(kH) for kw in range(kW)]              # (Cin,B,Ho,Wo)
    pt = jnp.stack(shifts, axis=1).reshape(K, M)                    # (K, M)
    pt = jnp.pad(pt, ((0, K_pad - K), (0, M_pad - M)))

    w_p = jnp.pad(w.reshape(Cout, K).astype(compute_dtype),
                  ((0, Cout_pad - Cout), (0, K_pad - K)))
    b_p = jnp.pad(b.astype(jnp.float32).reshape(Cout, 1),
                  ((0, Cout_pad - Cout), (0, 0)))

    cost = pl.CostEstimate(
        flops=2 * Cout_pad * M_pad * K_pad,
        bytes_accessed=(K_pad * M_pad + Cout_pad * K_pad) * in_item
                       + Cout_pad * M_pad * out_item,
        transcendentals=0)

    if single_k:
        grid = (M_pad // tn,)
        in_specs = [
            pl.BlockSpec((Cout_pad, K_pad), lambda m: (0, 0)),   # weight (resident)
            pl.BlockSpec((K_pad, tn), lambda m: (0, m)),         # patches (streamed)
            pl.BlockSpec((Cout_pad, 1), lambda m: (0, 0)),       # bias (resident)
        ]
        out_spec = pl.BlockSpec((Cout_pad, tn), lambda m: (0, m))
        kernel = _conv_gemm_kernel_single_k
        scratch = []
        dim_sem = ("parallel",)
    else:
        grid = (M_pad // tn, K_pad // tk_eff)
        in_specs = [
            pl.BlockSpec((Cout_pad, tk_eff), lambda m, k: (0, k)),
            pl.BlockSpec((tk_eff, tn), lambda m, k: (k, m)),
            pl.BlockSpec((Cout_pad, 1), lambda m, k: (0, 0)),
        ]
        out_spec = pl.BlockSpec((Cout_pad, tn), lambda m, k: (0, m))
        kernel = _conv_gemm_kernel_multi_k
        scratch = [pltpu.VMEM((Cout_pad, tn), jnp.float32)]
        dim_sem = ("parallel", "arbitrary")

    out = pl.pallas_call(
        kernel,
        out_shape=jax.ShapeDtypeStruct((Cout_pad, M_pad), out_dtype),
        grid_spec=pltpu.PrefetchScalarGridSpec(
            num_scalar_prefetch=0,
            grid=grid,
            in_specs=in_specs,
            out_specs=out_spec,
            scratch_shapes=scratch),
        compiler_params=pltpu.CompilerParams(
            dimension_semantics=dim_sem,
            allow_input_fusion=[False, True, False],
            vmem_limit_bytes=32 * 1024 * 1024),
        cost_estimate=cost,
    )(w_p, pt, b_p)

    # (Cout, M) is already channel-major: cheap leading-axis restore to NCHW.
    y = out[:Cout, :M].reshape(Cout, B, Ho, Wo).astype(x.dtype)
    return jnp.transpose(y, (1, 0, 2, 3))


def _reference(x, w, b):
    y = jax.lax.conv_general_dilated(
        x, w, window_strides=(1, 1), padding="VALID",
        dimension_numbers=("NCHW", "OIHW", "NCHW"))
    return jnp.maximum(y + b.reshape(1, -1, 1, 1), 0.0)


if __name__ == "__main__":
    key = jax.random.PRNGKey(0)

    # --- primary check: ConvModule(in_c=4, o_ch=8, kernel_size=3, dropout=0.1)
    B, Cin, H, W, Cout, ksz = 2, 4, 16, 16, 8, 3
    kx, kw_, kb, key = jax.random.split(key, 4)
    x = jax.random.normal(kx, (B, Cin, H, W), dtype=jnp.float32)
    w = jax.random.normal(kw_, (Cout, Cin, ksz, ksz), dtype=jnp.float32) * 0.1
    b = jax.random.normal(kb, (Cout,), dtype=jnp.float32) * 0.1

    y = jax.block_until_ready(conv_module_forward(x, w, b))
    y_ref = _reference(x, w, b)
    assert y.shape == y_ref.shape, (y.shape, y_ref.shape)
    # bf16 MXU inputs with f32 accumulation -> loosened tolerance vs f32 ref
    assert jnp.allclose(y, y_ref, atol=3e-2, rtol=3e-2), "mismatch (single-K path)"

    # --- secondary check: exercise the tiled-K fallback path -----------------
    Cin2, Cout2 = 32, 8
    kx, kw_, kb, key = jax.random.split(key, 4)
    x2 = jax.random.normal(kx, (B, Cin2, H, W), dtype=jnp.float32)
    w2 = jax.random.normal(kw_, (Cout2, Cin2, ksz, ksz), dtype=jnp.float32) * 0.1
    b2 = jax.random.normal(kb, (Cout2,), dtype=jnp.float32) * 0.1

    y2 = jax.block_until_ready(
        conv_module_forward(x2, w2, b2, max_single_k=128, tk=128))
    y2_ref = _reference(x2, w2, b2)
    assert y2.shape == y2_ref.shape, (y2.shape, y2_ref.shape)
    assert jnp.allclose(y2, y2_ref, atol=5e-2, rtol=5e-2), "mismatch (multi-K path)"

    print("KERNEL_OK")
</pallas_src>

<mosaic_0001>
module attributes {stable_mosaic.version = 11 : i64} {
  func.func @_conv_gemm_kernel_single_k(%arg0: i32, %arg1: memref<16x36xbf16, #tpu.memory_space<vmem>>, %arg2: memref<36x256xbf16, #tpu.memory_space<vmem>>, %arg3: memref<16x1xf32, #tpu.memory_space<vmem>>, %arg4: memref<16x256xf32, #tpu.memory_space<vmem>>) attributes {dimension_semantics = [#tpu.dimension_semantics<parallel>], iteration_bounds = array<i64: 2>, scalar_prefetch = 0 : i64, scratch_operands = 0 : i64, tpu.core_type = #tpu.core_type<tc>, window_params = [{pipeline_mode = #tpu.pipeline_mode<synchronous>, transform_indices = @transform_0, window_bounds = array<i64: 16, 36>}, {transform_indices = @transform_1, window_bounds = array<i64: 36, 256>}, {pipeline_mode = #tpu.pipeline_mode<synchronous>, transform_indices = @transform_2, window_bounds = array<i64: 16, 1>}, {transform_indices = @transform_3, window_bounds = array<i64: 16, 256>}]} {
    %c0 = arith.constant 0 : index
    %c0_0 = arith.constant 0 : index
    %0 = vector.load %arg1[%c0, %c0_0] : memref<16x36xbf16, #tpu.memory_space<vmem>>, vector<16x36xbf16>
    %c0_1 = arith.constant 0 : index
    %c0_2 = arith.constant 0 : index
    %1 = vector.load %arg2[%c0_1, %c0_2] : memref<36x256xbf16, #tpu.memory_space<vmem>>, vector<36x256xbf16>
    %cst = arith.constant dense<0.000000e+00> : vector<16x256xf32>
    %2 = tpu.matmul %0, %1, %cst {dimension_numbers = #tpu.dot_dimension_numbers<[1], [0], [0], [1], [0, 0, 1, 1], [], []>} : vector<16x36xbf16>, vector<36x256xbf16>, vector<16x256xf32> -> vector<16x256xf32>
    %c0_3 = arith.constant 0 : index
    %c0_4 = arith.constant 0 : index
    %3 = vector.load %arg3[%c0_3, %c0_4] : memref<16x1xf32, #tpu.memory_space<vmem>>, vector<16x1xf32>
    %4 = vector.broadcast %3 : vector<16x1xf32> to vector<16x256xf32>
    %5 = arith.addf %2, %4 : vector<16x256xf32>
    %cst_5 = arith.constant 0.000000e+00 : f32
    %6 = vector.broadcast %cst_5 : f32 to vector<16x256xf32>
    %7 = arith.maximumf %5, %6 : vector<16x256xf32>
    %c0_6 = arith.constant 0 : index
    %c0_7 = arith.constant 0 : index
    %8 = vector.load %arg4[%c0_6, %c0_7] : memref<16x256xf32, #tpu.memory_space<vmem>>, vector<16x256xf32>
    tpu.vector_store %arg4[%c0_6, %c0_7], %7 {strides = array<i32>} : memref<16x256xf32, #tpu.memory_space<vmem>>, vector<16x256xf32>,
    return
  }
  func.func @transform_0(%arg0: i32) -> (i32, i32) {
    %c0_i32 = arith.constant 0 : i32
    %c0_i32_0 = arith.constant 0 : i32
    %c0_i32_1 = arith.constant 0 : i32
    return %c0_i32, %c0_i32_0 : i32, i32
  }
  func.func @transform_1(%arg0: i32) -> (i32, i32) {
    %c0_i32 = arith.constant 0 : i32
    %c0_i32_0 = arith.constant 0 : i32
    return %c0_i32, %arg0 : i32, i32
  }
  func.func @transform_2(%arg0: i32) -> (i32, i32) {
    %c0_i32 = arith.constant 0 : i32
    %c0_i32_0 = arith.constant 0 : i32
    %c0_i32_1 = arith.constant 0 : i32
    return %c0_i32, %c0_i32_0 : i32, i32
  }
  func.func @transform_3(%arg0: i32) -> (i32, i32) {
    %c0_i32 = arith.constant 0 : i32
    %c0_i32_0 = arith.constant 0 : i32
    return %c0_i32, %arg0 : i32, i32
  }
}

</mosaic_0001>

<llo_original>
// kernel: tpu_custom_call.1
$region0: #{tpu_custom_call.1}
  #allocation0 [shape = 'u32[]', space=smem, size = 0x4, offset = 0x4, fixed_abs, tag = 'smem constant byte address 0x4 - core index']
  #allocation1 [shape = 'u32[144,128]{1,0:T(1,128)}', space=vmem, size = 0x12000, scoped, tag = 'internal scratch']
  %s0 = inlined_call_operand.vmem [shape: bf16[16,36], index: 0, kind: input, shape index: {}]
  %s1 = inlined_call_operand.hbm [shape: bf16[36,512], index: 1, kind: input, shape index: {}]
  %s2 = inlined_call_operand.vmem [shape: f32[16,1], index: 2, kind: input, shape index: {}]
  %s3 = inlined_call_operand.hbm [shape: f32[16,512], index: 3, kind: output, shape index: {}]
  %s4 = sld [smem:[#allocation0]]
  $region49: #{tpu_custom_call.1} parent=0
    _
  %s6 = ssub.s32 1, %s4
  %s7 = scalar_select 0, %s6, %s4
  $region1: #{tpu_custom_call.1} parent=0
    #allocation2 [shape = 'u8[40960]{0}', space=vmem, size = 0xa000, scoped, tag = 'input window, operand 1']
    #allocation3 [shape = 's32[2]{0}', space=sflag, size = 0x8, scoped, tag = 'scoped memory for tpu_custom_call.1']
    #allocation4 [shape = 's32[2]{0}', space=sflag, size = 0x8, scoped, tag = 'scoped memory for tpu_custom_call.1']
    #allocation5 [shape = 'u8[32768]{0}', space=vmem, size = 0x8000, scoped, tag = 'output window, operand 0']
    %8 = vsyncpa [#allocation3], 0
    %s9 = scalar_lea.sflag [#allocation3], 1
    %10 = vsyncpa %s9, 0
    %11 = vsyncpa [#allocation4], 0
    %s12 = scalar_lea.sflag [#allocation4], 1
    %13 = vsyncpa %s12, 0
    loop: start=0, step=1, limit=4
    $region2: #{tpu_custom_call.1} parent=1 // loop_pre_header
      _
    $region3: #{tpu_custom_call.1} parent=1 // loop_header
      %s15 = sphi 0, %s19
      %p16 = scmp.ge.s32.totalorder %s15, 4
      %s23 = sphi 0, %s23
      %s25 = sphi 0, %s23
      %s26 = sphi 0, %s25
      %s40 = sphi 0, %s26
      %s46 = sphi 0, %s48
      %s49 = sphi 0, %s46
      %s50 = sphi 0, %s49
      %s66 = sphi 0, %s50
      %s70 = sphi 0, %s70
      %s72 = sphi 0, %s70
      %s73 = sphi 0, %s72
      %s87 = sphi 0, %s73
      %s93 = sphi 0, %s95
      %s96 = sphi 0, %s93
      %s97 = sphi 0, %s96
      %s113 = sphi 0, %s97
    $region4: #{tpu_custom_call.1} parent=1 // loop_header_branch
      %18 = sbr.rel (%p16) target = $region8
    $region5: #{tpu_custom_call.1} parent=1 // loop_body
      %s20 = ssub.s32 %s15, 1
      %s21 = ssub.s32 %s15, 2
      %s22 = sadd.s32 %s15, 1
      %s24 = sadd.s32 %s23, 1
      %p27 = scmp.eq.s32.totalorder %s15, 1
      %p28 = scmp.ne.s32.totalorder %s23, %s25
      %p29 = scmp.eq.s32.totalorder %s15, 0
      %p30 = por %p28, %p29
      %p31 = scmp.ne.s32.totalorder %s23, %s25
      %p32 = scmp.eq.s32.totalorder %s20, 1
      %p33 = por %p31, %p32
      %p34 = scmp.ne.s32.totalorder %s25, %s26
      %p35 = scmp.eq.s32.totalorder %s20, 0
      %p36 = por %p34, %p35
      %p37 = scmp.ne.s32.totalorder %s25, %s26
      %p38 = scmp.eq.s32.totalorder %s21, 1
      %p39 = por %p37, %p38
      %p41 = scmp.ne.s32.totalorder %s26, %s40
      %p42 = scmp.eq.s32.totalorder %s21, 0
      %p43 = por %p41, %p42
      %s44 = ssub.s32 %s15, %s22
      %p45 = scmp.eq.s32.totalorder %s44, 0
      %s47 = sadd.s32 %s46, 1
      %s48 = scalar_select %p45, %s46, %s47
      %p51 = pneg %p45
      %p52 = scmp.eq.s32.totalorder %s15, 1
      %p53 = por %p51, %p52
      %p54 = scmp.ne.s32.totalorder %s46, %s49
      %p55 = scmp.eq.s32.totalorder %s15, 0
      %p56 = por %p54, %p55
      %p57 = scmp.ne.s32.totalorder %s46, %s49
      %p58 = scmp.eq.s32.totalorder %s20, 1
      %p59 = por %p57, %p58
      %p60 = scmp.ne.s32.totalorder %s49, %s50
      %p61 = scmp.eq.s32.totalorder %s20, 0
      %p62 = por %p60, %p61
      %p63 = scmp.ne.s32.totalorder %s49, %s50
      %p64 = scmp.eq.s32.totalorder %s21, 1
      %p65 = por %p63, %p64
      %p67 = scmp.ne.s32.totalorder %s50, %s66
      %p68 = scmp.eq.s32.totalorder %s21, 0
      %p69 = por %p67, %p68
      %s71 = sadd.s32 %s70, 1
      %p74 = scmp.eq.s32.totalorder %s15, 1
      %p75 = scmp.ne.s32.totalorder %s70, %s72
      %p76 = scmp.eq.s32.totalorder %s15, 0
      %p77 = por %p75, %p76
      %p78 = scmp.ne.s32.totalorder %s70, %s72
      %p79 = scmp.eq.s32.totalorder %s20, 1
      %p80 = por %p78, %p79
      %p81 = scmp.ne.s32.totalorder %s72, %s73
      %p82 = scmp.eq.s32.totalorder %s20, 0
      %p83 = por %p81, %p82
      %p84 = scmp.ne.s32.totalorder %s72, %s73
      %p85 = scmp.eq.s32.totalorder %s21, 1
      %p86 = por %p84, %p85
      %p88 = scmp.ne.s32.totalorder %s73, %s87
      %p89 = scmp.eq.s32.totalorder %s21, 0
      %p90 = por %p88, %p89
      %s91 = ssub.s32 %s15, %s22
      %p92 = scmp.eq.s32.totalorder %s91, 0
      %s94 = sadd.s32 %s93, 1
      %s95 = scalar_select %p92, %s93, %s94
      %p98 = pneg %p92
      %p99 = scmp.eq.s32.totalorder %s15, 1
      %p100 = por %p98, %p99
      %p101 = scmp.ne.s32.totalorder %s93, %s96
      %p102 = scmp.eq.s32.totalorder %s15, 0
      %p103 = por %p101, %p102
      %p104 = scmp.ne.s32.totalorder %s93, %s96
      %p105 = scmp.eq.s32.totalorder %s20, 1
      %p106 = por %p104, %p105
      %p107 = scmp.ne.s32.totalorder %s96, %s97
      %p108 = scmp.eq.s32.totalorder %s20, 0
      %p109 = por %p107, %p108
      %p110 = scmp.ne.s32.totalorder %s96, %s97
      %p111 = scmp.eq.s32.totalorder %s21, 1
      %p112 = por %p110, %p111
      %p114 = scmp.ne.s32.totalorder %s97, %s113
      %p115 = scmp.eq.s32.totalorder %s21, 0
      %p116 = por %p114, %p115
      %p117 = scmp.le.s32.totalorder 1, %s15
      %p118 = scmp.lt.s32.totalorder %s15, 3
      %p119 = pnand %p117, %p118
      %p120 = pneg %p119
      // Predicated region
      $region9: #{tpu_custom_call.1} parent=5 // pred_check
        _
      $region10: #{tpu_custom_call.1} parent=5 // pred_check_branch
        %122 = sbr.rel (%p119) target = $region12
      $region11: #{tpu_custom_call.1} parent=5 // pred_region
        %s123 = ssub.s32 %s15, 1
        // Predicated region
        $region13: #{tpu_custom_call.1} parent=11 // pred_check
          %p124 = pneg %p36
        $region14: #{tpu_custom_call.1} parent=11 // pred_check_branch
          %126 = sbr.rel (%p124) target = $region16
        $region15: #{tpu_custom_call.1} parent=11 // pred_region
          _
        $region16: #{tpu_custom_call.1} parent=11 // pred_fallthru
          _
        // Predicated region
        $region17: #{tpu_custom_call.1} parent=11 // pred_check
          %p127 = pneg %p83
        $region18: #{tpu_custom_call.1} parent=11 // pred_check_branch
          %129 = sbr.rel (%p127) target = $region20
        $region19: #{tpu_custom_call.1} parent=11 // pred_region
          _
        $region20: #{tpu_custom_call.1} parent=11 // pred_fallthru
          _
      $region12: #{tpu_custom_call.1} parent=5 // pred_fallthru
        _
      %p130 = scmp.lt.s32.totalorder %s15, 2
      // Predicated region
      $region21: #{tpu_custom_call.1} parent=5 // pred_check
        %p131 = pneg %p130
      $region22: #{tpu_custom_call.1} parent=5 // pred_check_branch
        %133 = sbr.rel (%p131) target = $region24
      $region23: #{tpu_custom_call.1} parent=5 // pred_region
        // Predicated region
        $region25: #{tpu_custom_call.1} parent=23 // pred_check
          %p134 = pneg %p56
        $region26: #{tpu_custom_call.1} parent=23 // pred_check_branch
          %136 = sbr.rel (%p134) target = $region28
        $region27: #{tpu_custom_call.1} parent=23 // pred_region
          %s137 = sand.u32 %s46, 1
          %s138 = scalar_lea.sflag [#allocation3], %s137
          %s139 = sand.u32 %s46, 1
          %s140 = smul.addr %s139, 40
          %s141 = scalar_lea.vmem [#allocation2], %s140
          %s142 = smul.u32 2, %s15
          %s144 = ssub.s32 640, 640
          %145 = vsyncadd %s138, %s144
          %s146 = smul.addr %s142, 64
          %s147 = scalar_lea.hbm %s1, %s146
          %s148 = sshll.u32 %s141, 4
          %s149 = int_to_ptr.vmem [resolvable:$true] %s148
          %154 = dma.hbm_to_vmem [thread:$0]  %s147, 640, %s149, %s138, 256, 128, 8
        $region28: #{tpu_custom_call.1} parent=23 // pred_fallthru
          _
      $region24: #{tpu_custom_call.1} parent=5 // pred_fallthru
        _
      %p155 = scmp.le.s32.totalorder 1, %s15
      %p156 = scmp.lt.s32.totalorder %s15, 3
      %p157 = pnand %p155, %p156
      %p158 = pneg %p157
      // Predicated region
      $region29: #{tpu_custom_call.1} parent=5 // pred_check
        _
      $region30: #{tpu_custom_call.1} parent=5 // pred_check_branch
        %160 = sbr.rel (%p157) target = $region32
      $region31: #{tpu_custom_call.1} parent=5 // pred_region
        %s161 = ssub.s32 %s15, 1
        %s162 = sand.u32 %s49, 1
        %s163 = scalar_lea.sflag [#allocation3], %s162
        %s164 = sand.u32 %s49, 1
        %s165 = smul.addr %s164, 40
        %s166 = scalar_lea.vmem [#allocation2], %s165
        // Predicated region
        $region33: #{tpu_custom_call.1} parent=31 // pred_check
          %p167 = pneg %p62
        $region34: #{tpu_custom_call.1} parent=31 // pred_check_branch
          %169 = sbr.rel (%p167) target = $region36
        $region35: #{tpu_custom_call.1} parent=31 // pred_region
          %170 = dma.done %s163, 640
        $region36: #{tpu_custom_call.1} parent=31 // pred_fallthru
          _
        %p171 = pneg %p36
        %p172 = pneg %p33
        %s173 = sand.u32 %s49, 1
        %s174 = scalar_lea.sflag [#allocation3], %s173
        %s175 = sand.u32 %s49, 1
        %s176 = smul.addr %s175, 40
        %s177 = scalar_lea.vmem [#allocation2], %s176
        %p178 = pneg %p62
        %p179 = pneg %p59
        %p180 = pneg %p83
        %p181 = pneg %p80
        %p182 = pneg %p109
        %p183 = pneg %p106
        %s184 = sand.u32 %s96, 1
        %s185 = scalar_lea.sflag [#allocation4], %s184
        %s186 = sand.u32 %s96, 1
        %s187 = smul.addr %s186, 32
        %s188 = scalar_lea.vmem [#allocation5], %s187
        %s189 = smul.u32 2, %s20
        %s190 = smul.u32 2, %s20
        %v192 = vld [vmem:[%s0] sm:$0xf]
        %v193 = vld [vmem:[%s0 + $0x4] sm:$0xf]
        %v194 = vld [vmem:[%s166] sm:$0xff]
        %v195 = vld [vmem:[%s166 + $0x8] sm:$0xff]
        %v196 = vld [vmem:[%s166 + $0x10] sm:$0xff]
        %v197 = vld [vmem:[%s166 + $0x18] sm:$0xff]
        %v198 = vld [vmem:[%s166 + $0x20] sm:$0x33]
        %v199 = vld [vmem:[%s2] sm:$0xff]
        %v200 = vld [vmem:[%s2 + $0x8] sm:$0xff]
        %202 = vset.pattern.permute.xlu0 0
        %203 = vperm.xlu0 %202, %v199
        %v204 = vpop.permute.xlu0 %203
        %207 = vset.pattern.permute.xlu0 0
        %208 = vperm.xlu0 %207, %v200
        %v209 = vpop.permute.xlu0 %208
        %v213 = vunpack.c.l.b16 %v192
        %v214 = vunpack.c.l.b16 %v193
        %v215 = vpack.c.b16 %v214, %v213
        %v221 = vunpack.c.l.b16 %v194
        %v222 = vunpack.c.h.b16 %v194
        %v223 = vunpack.c.l.b16 %v195
        %v224 = vunpack.c.h.b16 %v195
        %v225 = vunpack.c.l.b16 %v196
        %v226 = vunpack.c.h.b16 %v196
        %v227 = vunpack.c.l.b16 %v197
        %v228 = vunpack.c.h.b16 %v197
        %v229 = vunpack.c.l.b16 %v198
        %v230 = vunpack.c.h.b16 %v198
        %v231 = vpack.c.b16 %v223, %v221
        %v232 = vpack.c.b16 %v224, %v222
        %v233 = vpack.c.b16 %v227, %v225
        %v234 = vpack.c.b16 %v228, %v226
        %v235 = vpack.c.b16 %v229, %v229
        %v236 = vpack.c.b16 %v230, %v230
        %vm241 = vcmask 293888
        %v243 = vsel %vm241, %v215, 0
        %vm245 = vcmask 1041408
        %v247 = vsel %vm245, %v235, 0
        %v250 = vsel %vm245, %v236, 0
        %252 = vmatprep.subr.bf16.mxu0 %v232
        %253 = vmatpush1.bf16.msra.mxu0 %v231
        %254 = vmatprep.subr.bf16.mxu0 %v234
        %255 = vmatpush1.bf16.msra.mxu0 %v233
        %256 = vmatprep.subr.bf16.mxu0 %v250
        %257 = vmatpush1.bf16.msra.mxu0 %v247
        %258 = vmatprep.subr.bf16.mxu0 0
        %259 = vmatpush1.bf16.msra.mxu0 0
        %260 = vmatprep.subr.bf16.mxu0 0
        %261 = vmatpush1.bf16.msra.mxu0 0
        %262 = vmatprep.subr.bf16.mxu0 0
        %263 = vmatpush1.bf16.msra.mxu0 0
        %264 = vmatprep.subr.bf16.mxu0 0
        %265 = vmatpush1.bf16.msra.mxu0 0
        %266 = vmatprep.subr.bf16.mxu0 0
        %267 = vmatpush1.bf16.msra.mxu0 0
        %268 = vmatprep.subr.bf16.mxu0 0
        %269 = vmatpush1.bf16.msra.mxu0 0
        %270 = vmatprep.subr.bf16.mxu0 0
        %271 = vmatpush1.bf16.msra.mxu0 0
        %272 = vmatprep.subr.bf16.mxu0 0
        %273 = vmatpush1.bf16.msra.mxu0 0
        %274 = vmatprep.subr.bf16.mxu0 0
        %275 = vmatpush1.bf16.msra.mxu0 0
        %276 = vmatprep.subr.bf16.mxu0 0
        %277 = vmatpush1.bf16.msra.mxu0 0
        %278 = vmatprep.subr.bf16.mxu0 0
        %279 = vmatpush1.bf16.msra.mxu0 0
        %280 = vmatprep.subr.bf16.mxu0 0
        %281 = vmatpush1.bf16.msra.mxu0 0
        %282 = vmatprep.subr.bf16.mxu0 0
        %283 = vmatpush1.bf16.msra.mxu0 0
        %284 = vmatprep.mubr.bf16.mxu0 0
        %285 = vmatmul.mubr.bf16.gmra.mrb[0].mxu0 %v243
        %v286 = vpop.f32.mrb[0].mxu0
        %v287 = vadd.f32 %v204, %v286
        %v288 = vpop.f32.mrb[0].mxu0
        %v289 = vadd.f32 %v204, %v288
        %v290 = vpop.f32.mrb[0].mxu0
        %v291 = vadd.f32 %v209, %v290
        %v292 = vpop.f32.mrb[0].mxu0
        %v293 = vadd.f32 %v209, %v292
        %294 = vdwg.mxu0
        %v295 = vmax.f32 %v287, 0.0
        %v296 = vmax.f32 %v289, 0.0
        %v297 = vmax.f32 %v291, 0.0
        %v298 = vmax.f32 %v293, 0.0
        %299 = vst [vmem:[%s188] sm:$0xff] %v295
        %300 = vst [vmem:[%s188 + $0x8] sm:$0xff] %v296
        %301 = vst [vmem:[%s188 + $0x10] sm:$0xff] %v297
        %302 = vst [vmem:[%s188 + $0x18] sm:$0xff] %v298
        %s303 = sand.u32 %s96, 1
        %s304 = scalar_lea.sflag [#allocation4], %s303
        %s305 = sand.u32 %s96, 1
        %s306 = smul.addr %s305, 32
        %s307 = scalar_lea.vmem [#allocation5], %s306
        // Predicated region
        $region37: #{tpu_custom_call.1} parent=31 // pred_check
          %p308 = pneg %p106
        $region38: #{tpu_custom_call.1} parent=31 // pred_check_branch
          %310 = sbr.rel (%p308) target = $region40
        $region39: #{tpu_custom_call.1} parent=31 // pred_region
          %s311 = smul.u32 2, %s20
          %s313 = ssub.s32 512, 512
          %314 = vsyncadd %s304, %s313
          %s315 = smul.addr %s311, 128
          %s316 = scalar_lea.hbm %s3, %s315
          %s317 = sshll.u32 %s307, 4
          %s318 = int_to_ptr.vmem [resolvable:$true] %s317
          %323 = dma.vmem_to_hbm [thread:$0]  %s318, 512, %s316, %s304, 256, 512, 16
        $region40: #{tpu_custom_call.1} parent=31 // pred_fallthru
          _
      $region32: #{tpu_custom_call.1} parent=5 // pred_fallthru
        _
      %p324 = scmp.le.s32.totalorder 2, %s15
      // Predicated region
      $region41: #{tpu_custom_call.1} parent=5 // pred_check
        %p325 = pneg %p324
      $region42: #{tpu_custom_call.1} parent=5 // pred_check_branch
        %327 = sbr.rel (%p325) target = $region44
      $region43: #{tpu_custom_call.1} parent=5 // pred_region
        %s328 = ssub.s32 %s15, 2
        // Predicated region
        $region45: #{tpu_custom_call.1} parent=43 // pred_check
          %p329 = pneg %p112
        $region46: #{tpu_custom_call.1} parent=43 // pred_check_branch
          %331 = sbr.rel (%p329) target = $region48
        $region47: #{tpu_custom_call.1} parent=43 // pred_region
          %s332 = sand.u32 %s97, 1
          %s333 = scalar_lea.sflag [#allocation4], %s332
          %s334 = sand.u32 %s97, 1
          %s335 = smul.addr %s334, 32
          %s336 = scalar_lea.vmem [#allocation5], %s335
          %337 = dma.done %s333, 512
        $region48: #{tpu_custom_call.1} parent=43 // pred_fallthru
          _
      $region44: #{tpu_custom_call.1} parent=5 // pred_fallthru
        _
    $region6: #{tpu_custom_call.1} parent=1 // loop_footer
      %s19 = sadd.s32 1, %s15
    $region7: #{tpu_custom_call.1} parent=1 // loop_footer_branch
      %14 = sbr.rel target = $region3
    $region8: #{tpu_custom_call.1} parent=1 // loop_exit
      _
    %338 = vsyncpa [#allocation3], 1
    %s339 = scalar_lea.sflag [#allocation3], 1
    %340 = vsyncpa %s339, 1
    %341 = vsyncpa [#allocation4], 1
    %s342 = scalar_lea.sflag [#allocation4], 1
    %343 = vsyncpa %s342, 1

</llo_original>
